<compile_context>
chip_gen: v7x
topology: tpu7x:2x2x1
jax: 0.10.0
libtpu: 0.0.40
codegen_flags: <defaults>
</compile_context>

<pallas_src>
import jax
import jax.numpy as jnp
from jax.experimental import pallas as pl
from jax.experimental.pallas import tpu as pltpu


def _round_up(x, m):
    return ((x + m - 1) // m) * m


def _linear_embedding_kernel(x_ref, w_ref, o_ref):
    # x_ref: (TB, F) scalars; w_ref: (F, E) resident weight; o_ref: (TB, F, E).
    # In-kernel lane-splat of x along E: relayout + broadcast land on VPU/XLU
    # slots that are idle in this HBM-write-bound kernel.
    o_ref[...] = x_ref[...][:, :, None] * w_ref[...][None, :, :]


def _vmem_capacity_bytes():
    try:
        return int(pltpu.get_tpu_info().vmem_capacity_bytes)
    except Exception:
        return 64 * 1024 * 1024  # conservative: v7x per-TensorCore VMEM


def _pick_batch_tile(B, F, E, itemsize, vmem_cap, max_tile_bytes):
    """Batch-tile size, computed against padded (sublane/lane) VMEM bytes."""
    out_row = _round_up(F, 8) * _round_up(E, 128) * itemsize   # per batch row, out block
    x_row = _round_up(F, 128) * itemsize                       # per batch row, x block
    w_blk = _round_up(F, 8) * _round_up(E, 128) * itemsize     # resident weight block

    usable = (vmem_cap * 3) // 4                               # headroom for internal scratch
    budget = max(usable - 2 * w_blk, out_row)
    tb = min(B,
             max(1, max_tile_bytes // out_row),                # per-buffer output tile cap
             max(1, budget // (2 * (out_row + x_row))))        # double-buffered out + x

    if tb < B:
        tb = max(8, (tb // 8) * 8)                             # (8,128) tiling of the x block
    if B >= 16:
        # Keep >= 2 grid steps so the "parallel" batch axis can shard across
        # both TensorCores on v7x (harmless on single-TC v5e/v6e).
        tb = min(tb, _round_up(pl.cdiv(B, 2), 8))
    return min(tb, B)


def linear_embedding(x, weight, flatten_output=False, *,
                     max_tile_bytes=12 * 1024 * 1024, use_pallas=None):
    """LinearEmbedding forward: out[b, f, :] = x[b, f] * weight[f, :].

    x: (B, F) float32, weight: (F, E) float32 -> (B, F, E) or (B, F*E).
    """
    B, F = x.shape
    F_w, E = weight.shape
    assert F == F_w
    itemsize = x.dtype.itemsize

    # Tiny / lane-sparse shapes: fused XLA broadcast-multiply is already at
    # roofline; every Pallas output row would be a masked partial-lane store.
    if use_pallas is None:
        use_pallas = (E % 128 == 0) and (B * F * E * itemsize >= (1 << 20))
    if not use_pallas:
        out = weight[None, :, :] * x[:, :, None]
        return out.reshape(B, F * E) if flatten_output else out

    vmem_cap = _vmem_capacity_bytes()
    tb = _pick_batch_tile(B, F, E, itemsize, vmem_cap, max_tile_bytes)
    grid = (pl.cdiv(B, tb),)                 # ragged last block masked by Pallas

    # Explicit scoped-VMEM limit from the padded live set:
    # 2x out tile + 2x x tile + 2x weight block, plus margin.
    out_blk = tb * _round_up(F, 8) * _round_up(E, 128) * itemsize
    x_blk = _round_up(tb, 8) * _round_up(F, 128) * itemsize
    w_blk = _round_up(F, 8) * _round_up(E, 128) * itemsize
    vmem_limit = 2 * (out_blk + x_blk + w_blk) + (4 << 20)
    vmem_limit = int(max(16 << 20, min(vmem_cap, vmem_limit)))

    out = pl.pallas_call(
        _linear_embedding_kernel,
        out_shape=jax.ShapeDtypeStruct((B, F, E), x.dtype),
        grid=grid,
        in_specs=[
            pl.BlockSpec((tb, F), lambda i: (i, 0)),
            pl.BlockSpec((F, E), lambda i: (0, 0)),   # weight stays resident
        ],
        out_specs=pl.BlockSpec((tb, F, E), lambda i: (i, 0, 0)),
        compiler_params=pltpu.CompilerParams(
            dimension_semantics=("parallel",),
            vmem_limit_bytes=vmem_limit),
        cost_estimate=pl.CostEstimate(
            flops=B * F * E,
            transcendentals=0,
            bytes_accessed=itemsize * (B * F + F * E + B * F * E)),
    )(x, weight)

    if flatten_output:
        # Layout-free when E is a multiple of 128 (the only Pallas-path case).
        return out.reshape(B, F * E)
    return out


def make_embedding_weight(key, num_fields, embedding_size):
    """Deterministic xavier_uniform_ init (matches nn.init.xavier_uniform_)."""
    bound = jnp.sqrt(6.0 / (num_fields + embedding_size))
    return jax.random.uniform(
        key, (num_fields, embedding_size), dtype=jnp.float32,
        minval=-bound, maxval=bound)


if __name__ == "__main__":
    key = jax.random.PRNGKey(0)
    k_x, k_w, k_x2, k_w2, k_x3 = jax.random.split(key, 5)

    # 1) Module-default shapes: batch=2, num_dims=4, embedding_size=10.
    B, F, E = 2, 4, 10
    x_cont = jax.random.normal(k_x, (B, F), dtype=jnp.float32)
    weight = make_embedding_weight(k_w, F, E)
    ref = weight[None, :, :] * x_cont[:, :, None]

    out_auto = jax.block_until_ready(linear_embedding(x_cont, weight))  # XLA fallback path
    out_pl = jax.block_until_ready(
        linear_embedding(x_cont, weight, use_pallas=True))              # Pallas path, module shapes
    out_flat = jax.block_until_ready(
        linear_embedding(x_cont, weight, flatten_output=True, use_pallas=True))
    assert out_auto.shape == (B, F, E) and jnp.allclose(out_auto, ref, atol=1e-6)
    assert out_pl.shape == (B, F, E) and jnp.allclose(out_pl, ref, atol=1e-6)
    assert out_flat.shape == (B, F * E)
    assert jnp.allclose(out_flat, ref.reshape(B, -1), atol=1e-6)

    # 2) Lane-dense shape exercising the tiled Pallas path (grid of >= 2 steps).
    B2, F2, E2 = 512, 16, 128
    x2 = jax.random.normal(k_x2, (B2, F2), dtype=jnp.float32)
    w2 = make_embedding_weight(k_w2, F2, E2)
    out2 = jax.block_until_ready(linear_embedding(x2, w2))
    assert out2.shape == (B2, F2, E2)
    assert jnp.allclose(out2, w2[None, :, :] * x2[:, :, None], atol=1e-6)

    # 3) Ragged batch (B not a multiple of the tile) -> masked last block.
    B3 = 300
    x3 = jax.random.normal(k_x3, (B3, F2), dtype=jnp.float32)
    out3 = jax.block_until_ready(linear_embedding(x3, w2, flatten_output=True))
    ref3 = (w2[None, :, :] * x3[:, :, None]).reshape(B3, -1)
    assert out3.shape == (B3, F2 * E2)
    assert jnp.allclose(out3, ref3, atol=1e-6)

    print("KERNEL_OK")
</pallas_src>

<mosaic_0001>
module attributes {stable_mosaic.version = 11 : i64} {
  func.func @_linear_embedding_kernel(%arg0: i32, %arg1: memref<2x4xf32, #tpu.memory_space<vmem>>, %arg2: memref<4x10xf32, #tpu.memory_space<vmem>>, %arg3: memref<2x4x10xf32, #tpu.memory_space<vmem>>) attributes {dimension_semantics = [#tpu.dimension_semantics<parallel>], iteration_bounds = array<i64: 1>, scalar_prefetch = 0 : i64, scratch_operands = 0 : i64, tpu.core_type = #tpu.core_type<tc>, window_params = [{transform_indices = @transform_0, window_bounds = array<i64: 2, 4>}, {pipeline_mode = #tpu.pipeline_mode<synchronous>, transform_indices = @transform_1, window_bounds = array<i64: 4, 10>}, {transform_indices = @transform_2, window_bounds = array<i64: 2, 4, 10>}]} {
    %c0 = arith.constant 0 : index
    %c0_0 = arith.constant 0 : index
    %0 = vector.load %arg1[%c0, %c0_0] : memref<2x4xf32, #tpu.memory_space<vmem>>, vector<2x4xf32>
    %1 = vector.shape_cast %0 : vector<2x4xf32> to vector<2x4x1xf32>
    %c0_1 = arith.constant 0 : index
    %c0_2 = arith.constant 0 : index
    %2 = vector.load %arg2[%c0_1, %c0_2] : memref<4x10xf32, #tpu.memory_space<vmem>>, vector<4x10xf32>
    %3 = vector.shape_cast %2 : vector<4x10xf32> to vector<1x4x10xf32>
    %4 = vector.broadcast %1 : vector<2x4x1xf32> to vector<2x4x10xf32>
    %5 = vector.broadcast %3 : vector<1x4x10xf32> to vector<2x4x10xf32>
    %6 = arith.mulf %4, %5 : vector<2x4x10xf32>
    %c0_3 = arith.constant 0 : index
    %c0_4 = arith.constant 0 : index
    %c0_5 = arith.constant 0 : index
    %7 = vector.load %arg3[%c0_3, %c0_4, %c0_5] : memref<2x4x10xf32, #tpu.memory_space<vmem>>, vector<2x4x10xf32>
    tpu.vector_store %arg3[%c0_3, %c0_4, %c0_5], %6 {strides = array<i32>} : memref<2x4x10xf32, #tpu.memory_space<vmem>>, vector<2x4x10xf32>,
    return
  }
  func.func @transform_0(%arg0: i32) -> (i32, i32) {
    %c0_i32 = arith.constant 0 : i32
    %c0_i32_0 = arith.constant 0 : i32
    return %arg0, %c0_i32 : i32, i32
  }
  func.func @transform_1(%arg0: i32) -> (i32, i32) {
    %c0_i32 = arith.constant 0 : i32
    %c0_i32_0 = arith.constant 0 : i32
    %c0_i32_1 = arith.constant 0 : i32
    return %c0_i32, %c0_i32_0 : i32, i32
  }
  func.func @transform_2(%arg0: i32) -> (i32, i32, i32) {
    %c0_i32 = arith.constant 0 : i32
    %c0_i32_0 = arith.constant 0 : i32
    %c0_i32_1 = arith.constant 0 : i32
    return %arg0, %c0_i32, %c0_i32_0 : i32, i32, i32
  }
}

</mosaic_0001>

<llo_original>
// kernel: tpu_custom_call.1
$region0: #{tpu_custom_call.1}
  #allocation0 [shape = 'u32[]', space=smem, size = 0x4, offset = 0x4, fixed_abs, tag = 'smem constant byte address 0x4 - core index']
  #allocation1 [shape = 'u32[144,128]{1,0:T(1,128)}', space=vmem, size = 0x12000, scoped, tag = 'internal scratch']
  %s0 = inlined_call_operand.hbm [shape: f32[2,4], index: 0, kind: input, shape index: {}]
  %s1 = inlined_call_operand.hbm [shape: f32[4,10], index: 1, kind: input, shape index: {}]
  %s2 = inlined_call_operand.hbm [shape: f32[2,4,10], index: 2, kind: output, shape index: {}]
  %s3 = sld [smem:[#allocation0]]
  $region26: #{tpu_custom_call.1} parent=0
    _
  %s5 = ssub.s32 1, %s3
  %s6 = scalar_select 0, %s5, %s3
  $region1: #{tpu_custom_call.1} parent=0
    #allocation2 [shape = 'u8[1024]{0}', space=vmem, size = 0x400, scoped, tag = 'input window, operand 0, single buffered']
    #allocation3 [shape = 's32[1]{0}', space=sflag, size = 0x4, scoped, tag = 'scoped memory for tpu_custom_call.1']
    #allocation4 [shape = 's32[1]{0}', space=sflag, size = 0x4, scoped, tag = 'scoped memory for tpu_custom_call.1']
    #allocation5 [shape = 'u8[2048]{0}', space=vmem, size = 0x800, scoped, tag = 'input window, operand 1, single buffered']
    #allocation6 [shape = 's32[1]{0}', space=sflag, size = 0x4, scoped, tag = 'scoped memory for tpu_custom_call.1']
    #allocation7 [shape = 'u8[4096]{0}', space=vmem, size = 0x1000, scoped, tag = 'output window, operand 0, single buffered']
    %7 = vsyncpa [#allocation3], 0
    %8 = vsyncpa [#allocation6], 0
    %9 = vsyncpa [#allocation4], 0
    // Predicated region
    $region2: #{tpu_custom_call.1} parent=1 // pred_check
      _
    $region3: #{tpu_custom_call.1} parent=1 // pred_check_branch
      %11 = sbr.rel (0) target = $region5
    $region4: #{tpu_custom_call.1} parent=1 // pred_region
      %s13 = ssub.s32 32, 32
      %14 = vsyncadd [#allocation3], %s13
      %s16 = sshll.u32 [#allocation2], 4
      %s17 = int_to_ptr.vmem [resolvable:$true] %s16
      %19 = dma.hbm_to_vmem [thread:$0]  %s0, 32, %s17, [#allocation3]
    $region5: #{tpu_custom_call.1} parent=1 // pred_fallthru
      _
    // Predicated region
    $region6: #{tpu_custom_call.1} parent=1 // pred_check
      _
    $region7: #{tpu_custom_call.1} parent=1 // pred_check_branch
      %21 = sbr.rel (0) target = $region9
    $region8: #{tpu_custom_call.1} parent=1 // pred_region
      %s23 = ssub.s32 64, 64
      %24 = vsyncadd [#allocation6], %s23
      %s26 = sshll.u32 [#allocation5], 4
      %s27 = int_to_ptr.vmem [resolvable:$true] %s26
      %29 = dma.hbm_to_vmem [thread:$0]  %s1, 64, %s27, [#allocation6]
    $region9: #{tpu_custom_call.1} parent=1 // pred_fallthru
      _
    // Predicated region
    $region10: #{tpu_custom_call.1} parent=1 // pred_check
      _
    $region11: #{tpu_custom_call.1} parent=1 // pred_check_branch
      %31 = sbr.rel (0) target = $region13
    $region12: #{tpu_custom_call.1} parent=1 // pred_region
      %32 = dma.done [#allocation3], 32
    $region13: #{tpu_custom_call.1} parent=1 // pred_fallthru
      _
    // Predicated region
    $region14: #{tpu_custom_call.1} parent=1 // pred_check
      _
    $region15: #{tpu_custom_call.1} parent=1 // pred_check_branch
      %34 = sbr.rel (0) target = $region17
    $region16: #{tpu_custom_call.1} parent=1 // pred_region
      %35 = dma.done [#allocation6], 64
    $region17: #{tpu_custom_call.1} parent=1 // pred_fallthru
      _
    %v36 = vld [vmem:[#allocation2] sm:$0x3]
    %v37 = vlaneseq
    %v38 = vshrl.u32 %v37, 7
    %v39 = vsub.s32 0, %v38
    %v40 = vrot.slane %v36, %v39
    %42 = vbcast.lane.b32.xlu0 %v40, 256
    %v43 = vpop.permute.xlu0 %42
    %v44 = vlaneseq
    %v45 = vshrl.u32 %v44, 7
    %v46 = vsub.s32 1, %v45
    %v47 = vrot.slane %v36, %v46
    %49 = vbcast.lane.b32.xlu0 %v47, 256
    %v50 = vpop.permute.xlu0 %49
    %v51 = vld [vmem:[#allocation5] sm:$0xf]
    %v52 = vmul.f32 %v43, %v51
    %v53 = vmul.f32 %v50, %v51
    %vm54 = vcmask 76800
    %55 = vst.msk [vmem:[#allocation7] sm:$0xf] %vm54, %v52
    %56 = vst.msk [vmem:[#allocation7 + $0x4] sm:$0xf] %vm54, %v53
    // Predicated region
    $region18: #{tpu_custom_call.1} parent=1 // pred_check
      _
    $region19: #{tpu_custom_call.1} parent=1 // pred_check_branch
      %58 = sbr.rel (0) target = $region21
    $region20: #{tpu_custom_call.1} parent=1 // pred_region
      %s60 = ssub.s32 128, 128
      %61 = vsyncadd [#allocation4], %s60
      %s62 = sshll.u32 [#allocation7], 4
      %s63 = int_to_ptr.vmem [resolvable:$true] %s62
      %68 = dma.vmem_to_hbm [thread:$0]  %s63, 128, %s2, [#allocation4], 64, 64, 4
    $region21: #{tpu_custom_call.1} parent=1 // pred_fallthru
      _
    // Predicated region
    $region22: #{tpu_custom_call.1} parent=1 // pred_check
      _
    $region23: #{tpu_custom_call.1} parent=1 // pred_check_branch
      %70 = sbr.rel (0) target = $region25
    $region24: #{tpu_custom_call.1} parent=1 // pred_region
      %71 = dma.done [#allocation4], 128
    $region25: #{tpu_custom_call.1} parent=1 // pred_fallthru
      _
    %72 = vsyncpa [#allocation3], 1
    %73 = vsyncpa [#allocation6], 1
    %74 = vsyncpa [#allocation4], 1

</llo_original>
